<compile_context>
chip_gen: v7x
topology: tpu7x:2x2x1
jax: 0.10.0
libtpu: 0.0.40
codegen_flags: <defaults>
</compile_context>

<pallas_src>
import jax
import jax.numpy as jnp
import numpy as np
from jax import lax
from jax.experimental import pallas as pl
from jax.experimental.pallas import tpu as pltpu

# ---------------------------------------------------------------------------
# Model dimensions (small, consistent with the module's constructor).
# ---------------------------------------------------------------------------
NUM_LATENTS = 8
NUM_ACTIONS = 4
NUM_HIDDENS = 32
NUM_GAUSSIANS = 5
BATCH = 2
SEQ_LEN = 8
DIN = NUM_LATENTS + NUM_ACTIONS            # 12 = LSTM input size
DIN_PAD = 16                               # sublane-aligned input width
GL = NUM_GAUSSIANS * NUM_LATENTS           # 40 = mu / sigma head width

# Fused head-slab column layout: [mu | sigma | logits | reward | term | pad]
_MU0 = 0
_SIG0 = GL                                  # 40
_LP0 = 2 * GL                               # 80
_REW = 2 * GL + NUM_GAUSSIANS               # 85
_TERM = _REW + 1                            # 86
HEAD_WIDTH = _TERM + 1                      # 87
HEAD_PAD = 128                              # lane-dense output width

# Fused weight-slab row layout (every section starts on an 8-row boundary).
_R_WIH = 0                                  # rows [ 0, 16): W_ih^T (zero-padded rows 12..15)
_R_WHH = _R_WIH + DIN_PAD                   # rows [16, 48): W_hh^T
_R_BG = _R_WHH + NUM_HIDDENS                # rows [48, 56): row 48 = b_ih + b_hh
_R_WH = _R_BG + 8                           # rows [56, 88): fused head weights
_R_BH = _R_WH + NUM_HIDDENS                 # rows [88, 96): row 88 = fused head bias
SLAB_ROWS = _R_BH + 8                       # 96


# ---------------------------------------------------------------------------
# Pallas kernel: full sequence, single gridless invocation.
# ---------------------------------------------------------------------------
def _mdlstm_kernel(
    x_ref,          # (T*B, DIN_PAD)       time-major, flattened (t*B + b), zero-padded cols
    w_ref,          # (SLAB_ROWS, 128)     fused parameter slab
    out_ref,        # (T*B, HEAD_PAD)      fused head output slab
    hs_ref,         # (T*B, H)             VMEM scratch for hidden states
):
    T, B, H = SEQ_LEN, BATCH, NUM_HIDDENS

    # Static, aligned slices of the fused parameter slab.
    wih = w_ref[_R_WIH:_R_WIH + DIN_PAD, :]          # (16, 128)
    whh = w_ref[_R_WHH:_R_WHH + H, :]                # (32, 128)
    bg = w_ref[_R_BG:_R_BG + 1, :]                   # (1, 128)
    wh = w_ref[_R_WH:_R_WH + H, :]                   # (32, 128)
    bh = w_ref[_R_BH:_R_BH + 1, :]                   # (1, 128)

    # Hoisted input projection for all timesteps at once (off the serial path).
    x_proj = (
        jnp.dot(x_ref[...], wih, preferred_element_type=jnp.float32) + bg
    )                                                # (T*B, 4H)

    h = jnp.zeros((B, H), jnp.float32)
    c = jnp.zeros((B, H), jnp.float32)
    # Fully-unrolled recurrence: T is small and static; only h@W_hh + two gate
    # transcendentals + elementwise state update remain on the critical path.
    for t in range(T):
        gates = x_proj[t * B:(t + 1) * B, :] + jnp.dot(
            h, whh, preferred_element_type=jnp.float32)      # (B, 4H)
        # 2 EUP pushes on the whole gate tile instead of 4 per-slice pushes.
        sig = jax.nn.sigmoid(gates)
        tg = jnp.tanh(gates)
        # PyTorch LSTM gate order: i, f, g, o
        i_g = sig[:, 0 * H:1 * H]
        f_g = sig[:, 1 * H:2 * H]
        g_g = tg[:, 2 * H:3 * H]
        o_g = sig[:, 3 * H:4 * H]
        c = f_g * c + i_g * g_g
        h = o_g * jnp.tanh(c)
        hs_ref[t * B:(t + 1) * B, :] = h             # per-step store, no concat

    # One fused, lane-dense head matmul over the whole hidden slab.
    raw = (
        jnp.dot(hs_ref[...], wh, preferred_element_type=jnp.float32) + bh
    )                                                # (T*B, HEAD_PAD)

    col = lax.broadcasted_iota(jnp.int32, raw.shape, 1)
    is_sig = (col >= _SIG0) & (col < _SIG0 + GL)
    is_lp = (col >= _LP0) & (col < _LP0 + NUM_GAUSSIANS)
    is_term = col == _TERM

    # Masked log_softmax restricted to the NUM_GAUSSIANS valid logit lanes;
    # exp is taken on the pre-masked value so padded lanes cannot overflow.
    lp_masked = jnp.where(is_lp, raw, -1e30)
    m = jnp.max(lp_masked, axis=-1, keepdims=True)
    lse = jnp.log(
        jnp.sum(jnp.exp(lp_masked - m), axis=-1, keepdims=True)
    ) + m

    out = raw                                                # mu / reward: identity
    out = jnp.where(is_sig, jnp.exp(raw), out)               # sigma: exp
    out = jnp.where(is_lp, raw - lse, out)                   # mixture log-probs
    out = jnp.where(is_term, jax.nn.sigmoid(raw), out)       # termination prob
    out_ref[...] = out


# ---------------------------------------------------------------------------
# Parameter fusion (done ONCE, outside the per-call forward).
# ---------------------------------------------------------------------------
def fuse_params(p):
    """Pack all LSTM / head parameters into a single (96, 128) lane-dense slab."""
    H = NUM_HIDDENS
    wih = jnp.zeros((DIN_PAD, 4 * H), jnp.float32).at[:DIN, :].set(
        p["w_ih_T"].astype(jnp.float32))
    whh = p["w_hh_T"].astype(jnp.float32)
    bg = jnp.zeros((8, 4 * H), jnp.float32).at[0, :].set(
        (p["b_ih"] + p["b_hh"]).astype(jnp.float32)[0])

    w_heads = jnp.concatenate(
        [p["w_mu_T"], p["w_sigma_T"], p["w_p_T"], p["w_r_T"], p["w_t_T"]],
        axis=1).astype(jnp.float32)                              # (H, 87)
    w_heads = jnp.pad(w_heads, ((0, 0), (0, HEAD_PAD - HEAD_WIDTH)))
    b_heads = jnp.concatenate(
        [p["b_mu"], p["b_sigma"], p["b_p"], p["b_r"], p["b_t"]],
        axis=1).astype(jnp.float32)                              # (1, 87)
    b_heads = jnp.pad(b_heads, ((0, 0), (0, HEAD_PAD - HEAD_WIDTH)))
    bh = jnp.zeros((8, HEAD_PAD), jnp.float32).at[0, :].set(b_heads[0])

    slab = jnp.concatenate([wih, whh, bg, w_heads, bh], axis=0)  # (96, 128)
    assert slab.shape == (SLAB_ROWS, HEAD_PAD)
    return slab


# ---------------------------------------------------------------------------
# Wrapper: gridless pallas_call, slice outputs back to PyTorch layout.
# ---------------------------------------------------------------------------
@jax.jit
def mixture_density_lstm_forward(in_actions, in_latents, w_slab):
    """Pallas implementation of MixtureDensityLSTM.forward (sample=False)."""
    B, T = in_actions.shape[0], in_actions.shape[1]

    # Build time-major, zero-padded input slab (one concat does the padding).
    inputs = jnp.concatenate(
        [in_actions.astype(jnp.float32), in_latents.astype(jnp.float32),
         jnp.zeros((B, T, DIN_PAD - DIN), jnp.float32)], axis=-1)
    x_tm = jnp.transpose(inputs, (1, 0, 2)).reshape(T * B, DIN_PAD)

    vmem = pl.BlockSpec(memory_space=pltpu.MemorySpace.VMEM)
    slab = pl.pallas_call(
        _mdlstm_kernel,
        out_shape=jax.ShapeDtypeStruct((T * B, HEAD_PAD), jnp.float32),
        in_specs=[vmem, vmem],
        out_specs=vmem,
        scratch_shapes=[pltpu.VMEM((T * B, NUM_HIDDENS), jnp.float32)],
    )(x_tm, w_slab)

    # Back to PyTorch batch_first conventions.
    slab = jnp.transpose(slab.reshape(T, B, HEAD_PAD), (1, 0, 2))   # (B, T, 128)
    out_mus = slab[:, :, _MU0:_MU0 + GL].reshape(B, T, NUM_GAUSSIANS, NUM_LATENTS)
    out_sigmas = slab[:, :, _SIG0:_SIG0 + GL].reshape(B, T, NUM_GAUSSIANS, NUM_LATENTS)
    out_md_logprobs = slab[:, :, _LP0:_LP0 + NUM_GAUSSIANS]
    out_rewards = slab[:, :, _REW:_REW + 1]
    out_termination = slab[:, :, _TERM:_TERM + 1]
    sampled_z = None                     # sample=False path
    return out_mus, out_sigmas, out_md_logprobs, out_rewards, out_termination, sampled_z


# ---------------------------------------------------------------------------
# Deterministic parameter initialization (PyTorch-style uniform fan-in init).
# ---------------------------------------------------------------------------
def init_params(key):
    ks = jax.random.split(key, 16)

    def uni(k, shape, fan_in):
        bound = 1.0 / np.sqrt(fan_in)
        return jax.random.uniform(k, shape, jnp.float32, -bound, bound)

    H = NUM_HIDDENS
    params = {
        # LSTM (stored pre-transposed as [in, 4H] for the kernel's matmuls)
        "w_ih_T": uni(ks[0], (DIN, 4 * H), H),
        "w_hh_T": uni(ks[1], (H, 4 * H), H),
        "b_ih": uni(ks[2], (1, 4 * H), H),
        "b_hh": uni(ks[3], (1, 4 * H), H),
        # heads ([H, out] transposed weights, [1, out] biases)
        "w_mu_T": uni(ks[4], (H, GL), H),
        "b_mu": uni(ks[5], (1, GL), H),
        "w_sigma_T": uni(ks[6], (H, GL), H),
        "b_sigma": uni(ks[7], (1, GL), H),
        "w_p_T": uni(ks[8], (H, NUM_GAUSSIANS), H),
        "b_p": uni(ks[9], (1, NUM_GAUSSIANS), H),
        "w_r_T": uni(ks[10], (H, 1), H),
        "b_r": uni(ks[11], (1, 1), H),
        "w_t_T": uni(ks[12], (H, 1), H),
        "b_t": uni(ks[13], (1, 1), H),
    }
    return params


# ---------------------------------------------------------------------------
# Pure-JAX reference (lax.scan LSTM) for correctness checking.
# ---------------------------------------------------------------------------
def reference_forward(in_actions, in_latents, p):
    B, T = in_actions.shape[0], in_actions.shape[1]
    x = jnp.concatenate([in_actions, in_latents], axis=-1)   # (B, T, DIN)
    H = NUM_HIDDENS

    def step(carry, x_t):
        h, c = carry
        gates = x_t @ p["w_ih_T"] + p["b_ih"] + h @ p["w_hh_T"] + p["b_hh"]
        i = jax.nn.sigmoid(gates[:, 0 * H:1 * H])
        f = jax.nn.sigmoid(gates[:, 1 * H:2 * H])
        g = jnp.tanh(gates[:, 2 * H:3 * H])
        o = jax.nn.sigmoid(gates[:, 3 * H:4 * H])
        c = f * c + i * g
        h = o * jnp.tanh(c)
        return (h, c), h

    h0 = jnp.zeros((B, H), jnp.float32)
    _, hs = jax.lax.scan(step, (h0, h0), jnp.transpose(x, (1, 0, 2)))
    hs = jnp.transpose(hs, (1, 0, 2))                         # (B, T, H)

    mus = (hs @ p["w_mu_T"] + p["b_mu"]).reshape(B, T, NUM_GAUSSIANS, NUM_LATENTS)
    sigmas = jnp.exp(hs @ p["w_sigma_T"] + p["b_sigma"]).reshape(
        B, T, NUM_GAUSSIANS, NUM_LATENTS)
    lps = jax.nn.log_softmax(hs @ p["w_p_T"] + p["b_p"], axis=-1)
    rewards = hs @ p["w_r_T"] + p["b_r"]
    term = jax.nn.sigmoid(hs @ p["w_t_T"] + p["b_t"])
    return mus, sigmas, lps, rewards, term, None


# ---------------------------------------------------------------------------
if __name__ == "__main__":
    key = jax.random.PRNGKey(0)
    k_act, k_lat, k_param = jax.random.split(key, 3)

    in_actions = jax.random.normal(k_act, (BATCH, SEQ_LEN, NUM_ACTIONS), jnp.float32)
    in_latents = jax.random.normal(k_lat, (BATCH, SEQ_LEN, NUM_LATENTS), jnp.float32)
    params = init_params(k_param)

    # Parameter fusion happens once, outside the per-call forward.
    w_slab = jax.block_until_ready(fuse_params(params))

    outs = mixture_density_lstm_forward(in_actions, in_latents, w_slab)
    outs = jax.tree_util.tree_map(jax.block_until_ready,
                                  [o for o in outs if o is not None])

    refs = reference_forward(in_actions, in_latents, params)
    refs = [r for r in refs if r is not None]

    for got, ref in zip(outs, refs):
        np.testing.assert_allclose(np.asarray(got), np.asarray(ref),
                                   rtol=2e-3, atol=2e-3)

    print("KERNEL_OK")
</pallas_src>

<mosaic_0001>
module attributes {stable_mosaic.version = 11 : i64} {
  func.func @_mdlstm_kernel(%arg0: memref<16x16xf32, #tpu.memory_space<vmem>>, %arg1: memref<96x128xf32, #tpu.memory_space<vmem>>, %arg2: memref<16x128xf32, #tpu.memory_space<vmem>>, %arg3: memref<16x32xf32, #tpu.memory_space<vmem>>) attributes {dimension_semantics = [], scalar_prefetch = 0 : i64, scratch_operands = 1 : i64, tpu.core_type = #tpu.core_type<tc>} {
    %c0 = arith.constant 0 : index
    %c0_0 = arith.constant 0 : index
    %0 = vector.load %arg1[%c0, %c0_0] : memref<96x128xf32, #tpu.memory_space<vmem>>, vector<16x128xf32>
    %c16 = arith.constant 16 : index
    %c0_1 = arith.constant 0 : index
    %1 = vector.load %arg1[%c16, %c0_1] : memref<96x128xf32, #tpu.memory_space<vmem>>, vector<32x128xf32>
    %c48 = arith.constant 48 : index
    %c0_2 = arith.constant 0 : index
    %2 = vector.load %arg1[%c48, %c0_2] : memref<96x128xf32, #tpu.memory_space<vmem>>, vector<1x128xf32>
    %c56 = arith.constant 56 : index
    %c0_3 = arith.constant 0 : index
    %3 = vector.load %arg1[%c56, %c0_3] : memref<96x128xf32, #tpu.memory_space<vmem>>, vector<32x128xf32>
    %c88 = arith.constant 88 : index
    %c0_4 = arith.constant 0 : index
    %4 = vector.load %arg1[%c88, %c0_4] : memref<96x128xf32, #tpu.memory_space<vmem>>, vector<1x128xf32>
    %c0_5 = arith.constant 0 : index
    %c0_6 = arith.constant 0 : index
    %5 = vector.load %arg0[%c0_5, %c0_6] : memref<16x16xf32, #tpu.memory_space<vmem>>, vector<16x16xf32>
    %cst = arith.constant dense<0.000000e+00> : vector<16x128xf32>
    %6 = tpu.matmul %5, %0, %cst {dimension_numbers = #tpu.dot_dimension_numbers<[1], [0], [0], [1], [0, 0, 1, 1], [], []>} : vector<16x16xf32>, vector<16x128xf32>, vector<16x128xf32> -> vector<16x128xf32>
    %7 = vector.broadcast %2 : vector<1x128xf32> to vector<16x128xf32>
    %8 = arith.addf %6, %7 : vector<16x128xf32>
    %cst_7 = arith.constant 0.000000e+00 : f32
    %9 = vector.broadcast %cst_7 : f32 to vector<2x32xf32>
    %cst_8 = arith.constant 0.000000e+00 : f32
    %10 = vector.broadcast %cst_8 : f32 to vector<2x32xf32>
    %11 = vector.extract_strided_slice %8 {offsets = [0, 0], sizes = [2, 128], strides = [1, 1]} : vector<16x128xf32> to vector<2x128xf32>
    %cst_9 = arith.constant dense<0.000000e+00> : vector<2x128xf32>
    %12 = tpu.matmul %9, %1, %cst_9 {dimension_numbers = #tpu.dot_dimension_numbers<[1], [0], [0], [1], [0, 0, 1, 1], [], []>} : vector<2x32xf32>, vector<32x128xf32>, vector<2x128xf32> -> vector<2x128xf32>
    %13 = arith.addf %11, %12 : vector<2x128xf32>
    %14 = arith.negf %13 : vector<2x128xf32>
    %15 = math.exp %14 : vector<2x128xf32>
    %cst_10 = arith.constant 1.000000e+00 : f32
    %16 = vector.broadcast %cst_10 : f32 to vector<2x128xf32>
    %17 = arith.addf %16, %15 : vector<2x128xf32>
    %18 = arith.divf %16, %17 : vector<2x128xf32>
    %19 = math.tanh %13 : vector<2x128xf32>
    %20 = vector.extract_strided_slice %18 {offsets = [0, 0], sizes = [2, 32], strides = [1, 1]} : vector<2x128xf32> to vector<2x32xf32>
    %21 = vector.extract_strided_slice %18 {offsets = [0, 32], sizes = [2, 32], strides = [1, 1]} : vector<2x128xf32> to vector<2x32xf32>
    %22 = vector.extract_strided_slice %19 {offsets = [0, 64], sizes = [2, 32], strides = [1, 1]} : vector<2x128xf32> to vector<2x32xf32>
    %23 = vector.extract_strided_slice %18 {offsets = [0, 96], sizes = [2, 32], strides = [1, 1]} : vector<2x128xf32> to vector<2x32xf32>
    %24 = arith.mulf %21, %10 : vector<2x32xf32>
    %25 = arith.mulf %20, %22 : vector<2x32xf32>
    %26 = arith.addf %24, %25 : vector<2x32xf32>
    %27 = math.tanh %26 : vector<2x32xf32>
    %28 = arith.mulf %23, %27 : vector<2x32xf32>
    %c0_11 = arith.constant 0 : index
    %c0_12 = arith.constant 0 : index
    %29 = vector.load %arg3[%c0_11, %c0_12] : memref<16x32xf32, #tpu.memory_space<vmem>>, vector<2x32xf32>
    tpu.vector_store %arg3[%c0_11, %c0_12], %28 {strides = array<i32>} : memref<16x32xf32, #tpu.memory_space<vmem>>, vector<2x32xf32>,
    %30 = vector.extract_strided_slice %8 {offsets = [2, 0], sizes = [2, 128], strides = [1, 1]} : vector<16x128xf32> to vector<2x128xf32>
    %cst_13 = arith.constant dense<0.000000e+00> : vector<2x128xf32>
    %31 = tpu.matmul %28, %1, %cst_13 {dimension_numbers = #tpu.dot_dimension_numbers<[1], [0], [0], [1], [0, 0, 1, 1], [], []>} : vector<2x32xf32>, vector<32x128xf32>, vector<2x128xf32> -> vector<2x128xf32>
    %32 = arith.addf %30, %31 : vector<2x128xf32>
    %33 = arith.negf %32 : vector<2x128xf32>
    %34 = math.exp %33 : vector<2x128xf32>
    %cst_14 = arith.constant 1.000000e+00 : f32
    %35 = vector.broadcast %cst_14 : f32 to vector<2x128xf32>
    %36 = arith.addf %35, %34 : vector<2x128xf32>
    %37 = arith.divf %35, %36 : vector<2x128xf32>
    %38 = math.tanh %32 : vector<2x128xf32>
    %39 = vector.extract_strided_slice %37 {offsets = [0, 0], sizes = [2, 32], strides = [1, 1]} : vector<2x128xf32> to vector<2x32xf32>
    %40 = vector.extract_strided_slice %37 {offsets = [0, 32], sizes = [2, 32], strides = [1, 1]} : vector<2x128xf32> to vector<2x32xf32>
    %41 = vector.extract_strided_slice %38 {offsets = [0, 64], sizes = [2, 32], strides = [1, 1]} : vector<2x128xf32> to vector<2x32xf32>
    %42 = vector.extract_strided_slice %37 {offsets = [0, 96], sizes = [2, 32], strides = [1, 1]} : vector<2x128xf32> to vector<2x32xf32>
    %43 = arith.mulf %40, %26 : vector<2x32xf32>
    %44 = arith.mulf %39, %41 : vector<2x32xf32>
    %45 = arith.addf %43, %44 : vector<2x32xf32>
    %46 = math.tanh %45 : vector<2x32xf32>
    %47 = arith.mulf %42, %46 : vector<2x32xf32>
    %c2 = arith.constant 2 : index
    %c0_15 = arith.constant 0 : index
    %48 = vector.load %arg3[%c2, %c0_15] : memref<16x32xf32, #tpu.memory_space<vmem>>, vector<2x32xf32>
    tpu.vector_store %arg3[%c2, %c0_15], %47 {strides = array<i32>} : memref<16x32xf32, #tpu.memory_space<vmem>>, vector<2x32xf32>,
    %49 = vector.extract_strided_slice %8 {offsets = [4, 0], sizes = [2, 128], strides = [1, 1]} : vector<16x128xf32> to vector<2x128xf32>
    %cst_16 = arith.constant dense<0.000000e+00> : vector<2x128xf32>
    %50 = tpu.matmul %47, %1, %cst_16 {dimension_numbers = #tpu.dot_dimension_numbers<[1], [0], [0], [1], [0, 0, 1, 1], [], []>} : vector<2x32xf32>, vector<32x128xf32>, vector<2x128xf32> -> vector<2x128xf32>
    %51 = arith.addf %49, %50 : vector<2x128xf32>
    %52 = arith.negf %51 : vector<2x128xf32>
    %53 = math.exp %52 : vector<2x128xf32>
    %cst_17 = arith.constant 1.000000e+00 : f32
    %54 = vector.broadcast %cst_17 : f32 to vector<2x128xf32>
    %55 = arith.addf %54, %53 : vector<2x128xf32>
    %56 = arith.divf %54, %55 : vector<2x128xf32>
    %57 = math.tanh %51 : vector<2x128xf32>
    %58 = vector.extract_strided_slice %56 {offsets = [0, 0], sizes = [2, 32], strides = [1, 1]} : vector<2x128xf32> to vector<2x32xf32>
    %59 = vector.extract_strided_slice %56 {offsets = [0, 32], sizes = [2, 32], strides = [1, 1]} : vector<2x128xf32> to vector<2x32xf32>
    %60 = vector.extract_strided_slice %57 {offsets = [0, 64], sizes = [2, 32], strides = [1, 1]} : vector<2x128xf32> to vector<2x32xf32>
    %61 = vector.extract_strided_slice %56 {offsets = [0, 96], sizes = [2, 32], strides = [1, 1]} : vector<2x128xf32> to vector<2x32xf32>
    %62 = arith.mulf %59, %45 : vector<2x32xf32>
    %63 = arith.mulf %58, %60 : vector<2x32xf32>
    %64 = arith.addf %62, %63 : vector<2x32xf32>
    %65 = math.tanh %64 : vector<2x32xf32>
    %66 = arith.mulf %61, %65 : vector<2x32xf32>
    %c4 = arith.constant 4 : index
    %c0_18 = arith.constant 0 : index
    %67 = vector.load %arg3[%c4, %c0_18] : memref<16x32xf32, #tpu.memory_space<vmem>>, vector<2x32xf32>
    tpu.vector_store %arg3[%c4, %c0_18], %66 {strides = array<i32>} : memref<16x32xf32, #tpu.memory_space<vmem>>, vector<2x32xf32>,
    %68 = vector.extract_strided_slice %8 {offsets = [6, 0], sizes = [2, 128], strides = [1, 1]} : vector<16x128xf32> to vector<2x128xf32>
    %cst_19 = arith.constant dense<0.000000e+00> : vector<2x128xf32>
    %69 = tpu.matmul %66, %1, %cst_19 {dimension_numbers = #tpu.dot_dimension_numbers<[1], [0], [0], [1], [0, 0, 1, 1], [], []>} : vector<2x32xf32>, vector<32x128xf32>, vector<2x128xf32> -> vector<2x128xf32>
    %70 = arith.addf %68, %69 : vector<2x128xf32>
    %71 = arith.negf %70 : vector<2x128xf32>
    %72 = math.exp %71 : vector<2x128xf32>
    %cst_20 = arith.constant 1.000000e+00 : f32
    %73 = vector.broadcast %cst_20 : f32 to vector<2x128xf32>
    %74 = arith.addf %73, %72 : vector<2x128xf32>
    %75 = arith.divf %73, %74 : vector<2x128xf32>
    %76 = math.tanh %70 : vector<2x128xf32>
    %77 = vector.extract_strided_slice %75 {offsets = [0, 0], sizes = [2, 32], strides = [1, 1]} : vector<2x128xf32> to vector<2x32xf32>
    %78 = vector.extract_strided_slice %75 {offsets = [0, 32], sizes = [2, 32], strides = [1, 1]} : vector<2x128xf32> to vector<2x32xf32>
    %79 = vector.extract_strided_slice %76 {offsets = [0, 64], sizes = [2, 32], strides = [1, 1]} : vector<2x128xf32> to vector<2x32xf32>
    %80 = vector.extract_strided_slice %75 {offsets = [0, 96], sizes = [2, 32], strides = [1, 1]} : vector<2x128xf32> to vector<2x32xf32>
    %81 = arith.mulf %78, %64 : vector<2x32xf32>
    %82 = arith.mulf %77, %79 : vector<2x32xf32>
    %83 = arith.addf %81, %82 : vector<2x32xf32>
    %84 = math.tanh %83 : vector<2x32xf32>
    %85 = arith.mulf %80, %84 : vector<2x32xf32>
    %c6 = arith.constant 6 : index
    %c0_21 = arith.constant 0 : index
    %86 = vector.load %arg3[%c6, %c0_21] : memref<16x32xf32, #tpu.memory_space<vmem>>, vector<2x32xf32>
    tpu.vector_store %arg3[%c6, %c0_21], %85 {strides = array<i32>} : memref<16x32xf32, #tpu.memory_space<vmem>>, vector<2x32xf32>,
    %87 = vector.extract_strided_slice %8 {offsets = [8, 0], sizes = [2, 128], strides = [1, 1]} : vector<16x128xf32> to vector<2x128xf32>
    %cst_22 = arith.constant dense<0.000000e+00> : vector<2x128xf32>
    %88 = tpu.matmul %85, %1, %cst_22 {dimension_numbers = #tpu.dot_dimension_numbers<[1], [0], [0], [1], [0, 0, 1, 1], [], []>} : vector<2x32xf32>, vector<32x128xf32>, vector<2x128xf32> -> vector<2x128xf32>
    %89 = arith.addf %87, %88 : vector<2x128xf32>
    %90 = arith.negf %89 : vector<2x128xf32>
    %91 = math.exp %90 : vector<2x128xf32>
    %cst_23 = arith.constant 1.000000e+00 : f32
    %92 = vector.broadcast %cst_23 : f32 to vector<2x128xf32>
    %93 = arith.addf %92, %91 : vector<2x128xf32>
    %94 = arith.divf %92, %93 : vector<2x128xf32>
    %95 = math.tanh %89 : vector<2x128xf32>
    %96 = vector.extract_strided_slice %94 {offsets = [0, 0], sizes = [2, 32], strides = [1, 1]} : vector<2x128xf32> to vector<2x32xf32>
    %97 = vector.extract_strided_slice %94 {offsets = [0, 32], sizes = [2, 32], strides = [1, 1]} : vector<2x128xf32> to vector<2x32xf32>
    %98 = vector.extract_strided_slice %95 {offsets = [0, 64], sizes = [2, 32], strides = [1, 1]} : vector<2x128xf32> to vector<2x32xf32>
    %99 = vector.extract_strided_slice %94 {offsets = [0, 96], sizes = [2, 32], strides = [1, 1]} : vector<2x128xf32> to vector<2x32xf32>
    %100 = arith.mulf %97, %83 : vector<2x32xf32>
    %101 = arith.mulf %96, %98 : vector<2x32xf32>
    %102 = arith.addf %100, %101 : vector<2x32xf32>
    %103 = math.tanh %102 : vector<2x32xf32>
    %104 = arith.mulf %99, %103 : vector<2x32xf32>
    %c8 = arith.constant 8 : index
    %c0_24 = arith.constant 0 : index
    %105 = vector.load %arg3[%c8, %c0_24] : memref<16x32xf32, #tpu.memory_space<vmem>>, vector<2x32xf32>
    tpu.vector_store %arg3[%c8, %c0_24], %104 {strides = array<i32>} : memref<16x32xf32, #tpu.memory_space<vmem>>, vector<2x32xf32>,
    %106 = vector.extract_strided_slice %8 {offsets = [10, 0], sizes = [2, 128], strides = [1, 1]} : vector<16x128xf32> to vector<2x128xf32>
    %cst_25 = arith.constant dense<0.000000e+00> : vector<2x128xf32>
    %107 = tpu.matmul %104, %1, %cst_25 {dimension_numbers = #tpu.dot_dimension_numbers<[1], [0], [0], [1], [0, 0, 1, 1], [], []>} : vector<2x32xf32>, vector<32x128xf32>, vector<2x128xf32> -> vector<2x128xf32>
    %108 = arith.addf %106, %107 : vector<2x128xf32>
    %109 = arith.negf %108 : vector<2x128xf32>
    %110 = math.exp %109 : vector<2x128xf32>
    %cst_26 = arith.constant 1.000000e+00 : f32
    %111 = vector.broadcast %cst_26 : f32 to vector<2x128xf32>
    %112 = arith.addf %111, %110 : vector<2x128xf32>
    %113 = arith.divf %111, %112 : vector<2x128xf32>
    %114 = math.tanh %108 : vector<2x128xf32>
    %115 = vector.extract_strided_slice %113 {offsets = [0, 0], sizes = [2, 32], strides = [1, 1]} : vector<2x128xf32> to vector<2x32xf32>
    %116 = vector.extract_strided_slice %113 {offsets = [0, 32], sizes = [2, 32], strides = [1, 1]} : vector<2x128xf32> to vector<2x32xf32>
    %117 = vector.extract_strided_slice %114 {offsets = [0, 64], sizes = [2, 32], strides = [1, 1]} : vector<2x128xf32> to vector<2x32xf32>
    %118 = vector.extract_strided_slice %113 {offsets = [0, 96], sizes = [2, 32], strides = [1, 1]} : vector<2x128xf32> to vector<2x32xf32>
    %119 = arith.mulf %116, %102 : vector<2x32xf32>
    %120 = arith.mulf %115, %117 : vector<2x32xf32>
    %121 = arith.addf %119, %120 : vector<2x32xf32>
    %122 = math.tanh %121 : vector<2x32xf32>
    %123 = arith.mulf %118, %122 : vector<2x32xf32>
    %c10 = arith.constant 10 : index
    %c0_27 = arith.constant 0 : index
    %124 = vector.load %arg3[%c10, %c0_27] : memref<16x32xf32, #tpu.memory_space<vmem>>, vector<2x32xf32>
    tpu.vector_store %arg3[%c10, %c0_27], %123 {strides = array<i32>} : memref<16x32xf32, #tpu.memory_space<vmem>>, vector<2x32xf32>,
    %125 = vector.extract_strided_slice %8 {offsets = [12, 0], sizes = [2, 128], strides = [1, 1]} : vector<16x128xf32> to vector<2x128xf32>
    %cst_28 = arith.constant dense<0.000000e+00> : vector<2x128xf32>
    %126 = tpu.matmul %123, %1, %cst_28 {dimension_numbers = #tpu.dot_dimension_numbers<[1], [0], [0], [1], [0, 0, 1, 1], [], []>} : vector<2x32xf32>, vector<32x128xf32>, vector<2x128xf32> -> vector<2x128xf32>
    %127 = arith.addf %125, %126 : vector<2x128xf32>
    %128 = arith.negf %127 : vector<2x128xf32>
    %129 = math.exp %128 : vector<2x128xf32>
    %cst_29 = arith.constant 1.000000e+00 : f32
    %130 = vector.broadcast %cst_29 : f32 to vector<2x128xf32>
    %131 = arith.addf %130, %129 : vector<2x128xf32>
    %132 = arith.divf %130, %131 : vector<2x128xf32>
    %133 = math.tanh %127 : vector<2x128xf32>
    %134 = vector.extract_strided_slice %132 {offsets = [0, 0], sizes = [2, 32], strides = [1, 1]} : vector<2x128xf32> to vector<2x32xf32>
    %135 = vector.extract_strided_slice %132 {offsets = [0, 32], sizes = [2, 32], strides = [1, 1]} : vector<2x128xf32> to vector<2x32xf32>
    %136 = vector.extract_strided_slice %133 {offsets = [0, 64], sizes = [2, 32], strides = [1, 1]} : vector<2x128xf32> to vector<2x32xf32>
    %137 = vector.extract_strided_slice %132 {offsets = [0, 96], sizes = [2, 32], strides = [1, 1]} : vector<2x128xf32> to vector<2x32xf32>
    %138 = arith.mulf %135, %121 : vector<2x32xf32>
    %139 = arith.mulf %134, %136 : vector<2x32xf32>
    %140 = arith.addf %138, %139 : vector<2x32xf32>
    %141 = math.tanh %140 : vector<2x32xf32>
    %142 = arith.mulf %137, %141 : vector<2x32xf32>
    %c12 = arith.constant 12 : index
    %c0_30 = arith.constant 0 : index
    %143 = vector.load %arg3[%c12, %c0_30] : memref<16x32xf32, #tpu.memory_space<vmem>>, vector<2x32xf32>
    tpu.vector_store %arg3[%c12, %c0_30], %142 {strides = array<i32>} : memref<16x32xf32, #tpu.memory_space<vmem>>, vector<2x32xf32>,
    %144 = vector.extract_strided_slice %8 {offsets = [14, 0], sizes = [2, 128], strides = [1, 1]} : vector<16x128xf32> to vector<2x128xf32>
    %cst_31 = arith.constant dense<0.000000e+00> : vector<2x128xf32>
    %145 = tpu.matmul %142, %1, %cst_31 {dimension_numbers = #tpu.dot_dimension_numbers<[1], [0], [0], [1], [0, 0, 1, 1], [], []>} : vector<2x32xf32>, vector<32x128xf32>, vector<2x128xf32> -> vector<2x128xf32>
    %146 = arith.addf %144, %145 : vector<2x128xf32>
    %147 = arith.negf %146 : vector<2x128xf32>
    %148 = math.exp %147 : vector<2x128xf32>
    %cst_32 = arith.constant 1.000000e+00 : f32
    %149 = vector.broadcast %cst_32 : f32 to vector<2x128xf32>
    %150 = arith.addf %149, %148 : vector<2x128xf32>
    %151 = arith.divf %149, %150 : vector<2x128xf32>
    %152 = math.tanh %146 : vector<2x128xf32>
    %153 = vector.extract_strided_slice %151 {offsets = [0, 0], sizes = [2, 32], strides = [1, 1]} : vector<2x128xf32> to vector<2x32xf32>
    %154 = vector.extract_strided_slice %151 {offsets = [0, 32], sizes = [2, 32], strides = [1, 1]} : vector<2x128xf32> to vector<2x32xf32>
    %155 = vector.extract_strided_slice %152 {offsets = [0, 64], sizes = [2, 32], strides = [1, 1]} : vector<2x128xf32> to vector<2x32xf32>
    %156 = vector.extract_strided_slice %151 {offsets = [0, 96], sizes = [2, 32], strides = [1, 1]} : vector<2x128xf32> to vector<2x32xf32>
    %157 = arith.mulf %154, %140 : vector<2x32xf32>
    %158 = arith.mulf %153, %155 : vector<2x32xf32>
    %159 = arith.addf %157, %158 : vector<2x32xf32>
    %160 = math.tanh %159 : vector<2x32xf32>
    %161 = arith.mulf %156, %160 : vector<2x32xf32>
    %c14 = arith.constant 14 : index
    %c0_33 = arith.constant 0 : index
    %162 = vector.load %arg3[%c14, %c0_33] : memref<16x32xf32, #tpu.memory_space<vmem>>, vector<2x32xf32>
    tpu.vector_store %arg3[%c14, %c0_33], %161 {strides = array<i32>} : memref<16x32xf32, #tpu.memory_space<vmem>>, vector<2x32xf32>,
    %c0_34 = arith.constant 0 : index
    %c0_35 = arith.constant 0 : index
    %163 = vector.load %arg3[%c0_34, %c0_35] : memref<16x32xf32, #tpu.memory_space<vmem>>, vector<16x32xf32>
    %cst_36 = arith.constant dense<0.000000e+00> : vector<16x128xf32>
    %164 = tpu.matmul %163, %3, %cst_36 {dimension_numbers = #tpu.dot_dimension_numbers<[1], [0], [0], [1], [0, 0, 1, 1], [], []>} : vector<16x32xf32>, vector<32x128xf32>, vector<16x128xf32> -> vector<16x128xf32>
    %165 = vector.broadcast %4 : vector<1x128xf32> to vector<16x128xf32>
    %166 = arith.addf %164, %165 : vector<16x128xf32>
    %167 = tpu.iota {dimensions = array<i32: 1>} : vector<16x128xi32>
    %c40_i32 = arith.constant 40 : i32
    %168 = vector.broadcast %c40_i32 : i32 to vector<16x128xi32>
    %169 = arith.cmpi sge, %167, %168 : vector<16x128xi32>
    %c80_i32 = arith.constant 80 : i32
    %170 = vector.broadcast %c80_i32 : i32 to vector<16x128xi32>
    %171 = arith.cmpi slt, %167, %170 : vector<16x128xi32>
    %172 = arith.andi %169, %171 : vector<16x128xi1>
    %c80_i32_37 = arith.constant 80 : i32
    %173 = vector.broadcast %c80_i32_37 : i32 to vector<16x128xi32>
    %174 = arith.cmpi sge, %167, %173 : vector<16x128xi32>
    %c85_i32 = arith.constant 85 : i32
    %175 = vector.broadcast %c85_i32 : i32 to vector<16x128xi32>
    %176 = arith.cmpi slt, %167, %175 : vector<16x128xi32>
    %177 = arith.andi %174, %176 : vector<16x128xi1>
    %c86_i32 = arith.constant 86 : i32
    %178 = vector.broadcast %c86_i32 : i32 to vector<16x128xi32>
    %179 = arith.cmpi eq, %167, %178 : vector<16x128xi32>
    %cst_38 = arith.constant -1.000000e+30 : f32
    %180 = vector.broadcast %cst_38 : f32 to vector<16x128xf32>
    %181 = arith.select %177, %166, %180 : vector<16x128xi1>, vector<16x128xf32>
    %cst_39 = arith.constant dense<0xFF800000> : vector<16xf32>
    %182 = vector.multi_reduction <maximumf>, %181, %cst_39 [1] : vector<16x128xf32> to vector<16xf32>
    %183 = vector.shape_cast %182 : vector<16xf32> to vector<16x1xf32>
    %184 = vector.broadcast %183 : vector<16x1xf32> to vector<16x128xf32>
    %185 = arith.subf %181, %184 : vector<16x128xf32>
    %186 = math.exp %185 : vector<16x128xf32>
    %cst_40 = arith.constant dense<0.000000e+00> : vector<16xf32>
    %187 = vector.multi_reduction <add>, %186, %cst_40 [1] : vector<16x128xf32> to vector<16xf32>
    %188 = vector.shape_cast %187 : vector<16xf32> to vector<16x1xf32>
    %189 = math.log %188 : vector<16x1xf32>
    %190 = arith.addf %189, %183 : vector<16x1xf32>
    %191 = math.exp %166 : vector<16x128xf32>
    %192 = arith.select %172, %191, %166 : vector<16x128xi1>, vector<16x128xf32>
    %193 = vector.broadcast %190 : vector<16x1xf32> to vector<16x128xf32>
    %194 = arith.subf %166, %193 : vector<16x128xf32>
    %195 = arith.select %177, %194, %192 : vector<16x128xi1>, vector<16x128xf32>
    %196 = arith.negf %166 : vector<16x128xf32>
    %197 = math.exp %196 : vector<16x128xf32>
    %cst_41 = arith.constant 1.000000e+00 : f32
    %198 = vector.broadcast %cst_41 : f32 to vector<16x128xf32>
    %199 = arith.addf %198, %197 : vector<16x128xf32>
    %200 = arith.divf %198, %199 : vector<16x128xf32>
    %201 = arith.select %179, %200, %195 : vector<16x128xi1>, vector<16x128xf32>
    %c0_42 = arith.constant 0 : index
    %c0_43 = arith.constant 0 : index
    %202 = vector.load %arg2[%c0_42, %c0_43] : memref<16x128xf32, #tpu.memory_space<vmem>>, vector<16x128xf32>
    tpu.vector_store %arg2[%c0_42, %c0_43], %201 {strides = array<i32>} : memref<16x128xf32, #tpu.memory_space<vmem>>, vector<16x128xf32>,
    return
  }
}

</mosaic_0001>

<llo_original>
// kernel: mixture_density_lstm_forward.1
$region0: #{mixture_density_lstm_forward.1}
  #allocation0 [shape = 'u32[]', space=smem, size = 0x4, offset = 0x4, fixed_abs, tag = 'smem constant byte address 0x4 - core index']
  #allocation1 [shape = 'u32[144,128]{1,0:T(1,128)}', space=vmem, size = 0x12000, scoped, tag = 'internal scratch']
  #allocation2 [shape = 'f32[16,32]{1,0:T(8,128)}', space=vmem, size = 0x2000, scoped, tag = 'scratch operand']
  %s0 = inlined_call_operand.vmem [shape: f32[16,16], index: 0, kind: input, shape index: {}]
  %s1 = inlined_call_operand.vmem [shape: f32[96,128], index: 1, kind: input, shape index: {}]
  %s2 = inlined_call_operand.vmem [shape: f32[16,128], index: 2, kind: output, shape index: {}]
  %s3 = sld [smem:[#allocation0]]
  $region18: #{mixture_density_lstm_forward.1} parent=0
    _
  %s5 = ssub.s32 1, %s3
  %s6 = scalar_select 0, %s5, %s3
  // Predicated region
  $region2: #{mixture_density_lstm_forward.1} parent=0 // pred_check
    _
  $region3: #{mixture_density_lstm_forward.1} parent=0 // pred_check_branch
    %8 = sbr.rel (0) target = $region5
  $region4: #{mixture_density_lstm_forward.1} parent=0 // pred_region
    _
  $region5: #{mixture_density_lstm_forward.1} parent=0 // pred_fallthru
    _
  // Predicated region
  $region6: #{mixture_density_lstm_forward.1} parent=0 // pred_check
    _
  $region7: #{mixture_density_lstm_forward.1} parent=0 // pred_check_branch
    %10 = sbr.rel (0) target = $region9
  $region8: #{mixture_density_lstm_forward.1} parent=0 // pred_region
    _
  $region9: #{mixture_density_lstm_forward.1} parent=0 // pred_fallthru
    _
  %v11 = vld [vmem:[%s1] sm:$0xff]
  %v12 = vld [vmem:[%s1 + $0x8] sm:$0xff]
  %v13 = vld [vmem:[%s1 + $0x10] sm:$0xff]
  %v14 = vld [vmem:[%s1 + $0x18] sm:$0xff]
  %v15 = vld [vmem:[%s1 + $0x20] sm:$0xff]
  %v16 = vld [vmem:[%s1 + $0x28] sm:$0xff]
  %v17 = vld [vmem:[%s1 + $0x30] sm:$0x1]
  %v18 = vld [vmem:[%s1 + $0x38] sm:$0xff]
  %v19 = vld [vmem:[%s1 + $0x40] sm:$0xff]
  %v20 = vld [vmem:[%s1 + $0x48] sm:$0xff]
  %v21 = vld [vmem:[%s1 + $0x50] sm:$0xff]
  %v22 = vld [vmem:[%s1 + $0x58] sm:$0x1]
  %v23 = vld [vmem:[%s0] sm:$0xff]
  %v24 = vld [vmem:[%s0 + $0x8] sm:$0xff]
  %v25 = vlaneseq
  %v26 = vshrl.u32 %v25, 7
  %v27 = vsub.s32 0, %v26
  %v28 = vrot.slane %v17, %v27
  %vm29 = vcmask 130048
  %v31 = vsel %vm29, %v23, 0
  %v34 = vsel %vm29, %v24, 0
  %36 = vmatprep.subr.mxu0 0.0
  %37 = vmatpush1.msra.mxu0 %v11
  %38 = vmatprep.subr.mxu0 0.0
  %39 = vmatpush1.msra.mxu0 %v12
  %40 = vmatprep.subr.mxu0 0.0
  %41 = vmatpush1.msra.mxu0 0.0
  %42 = vmatprep.subr.mxu0 0.0
  %43 = vmatpush1.msra.mxu0 0.0
  %44 = vmatprep.subr.mxu0 0.0
  %45 = vmatpush1.msra.mxu0 0.0
  %46 = vmatprep.subr.mxu0 0.0
  %47 = vmatpush1.msra.mxu0 0.0
  %48 = vmatprep.subr.mxu0 0.0
  %49 = vmatpush1.msra.mxu0 0.0
  %50 = vmatprep.subr.mxu0 0.0
  %51 = vmatpush1.msra.mxu0 0.0
  %52 = vmatprep.subr.mxu0 0.0
  %53 = vmatpush1.msra.mxu0 0.0
  %54 = vmatprep.subr.mxu0 0.0
  %55 = vmatpush1.msra.mxu0 0.0
  %56 = vmatprep.subr.mxu0 0.0
  %57 = vmatpush1.msra.mxu0 0.0
  %58 = vmatprep.subr.mxu0 0.0
  %59 = vmatpush1.msra.mxu0 0.0
  %60 = vmatprep.subr.mxu0 0.0
  %61 = vmatpush1.msra.mxu0 0.0
  %62 = vmatprep.subr.mxu0 0.0
  %63 = vmatpush1.msra.mxu0 0.0
  %64 = vmatprep.subr.mxu0 0.0
  %65 = vmatpush1.msra.mxu0 0.0
  %66 = vmatprep.subr.mxu0 0.0
  %67 = vmatpush1.msra.mxu0 0.0
  %68 = vmatprep.subr.mxu0 0.0
  %69 = vmatpush1.msra.mxu0 0.0
  %70 = vmatprep.subr.mxu0 0.0
  %71 = vmatpush1.msra.mxu0 0.0
  %72 = vmatprep.subr.mxu0 0.0
  %73 = vmatpush1.msra.mxu0 0.0
  %74 = vmatprep.subr.mxu0 0.0
  %75 = vmatpush1.msra.mxu0 0.0
  %76 = vmatprep.subr.mxu0 0.0
  %77 = vmatpush1.msra.mxu0 0.0
  %78 = vmatprep.subr.mxu0 0.0
  %79 = vmatpush1.msra.mxu0 0.0
  %80 = vmatprep.subr.mxu0 0.0
  %81 = vmatpush1.msra.mxu0 0.0
  %82 = vmatprep.subr.mxu0 0.0
  %83 = vmatpush1.msra.mxu0 0.0
  %84 = vmatprep.subr.mxu0 0.0
  %85 = vmatpush1.msra.mxu0 0.0
  %86 = vmatprep.subr.mxu0 0.0
  %87 = vmatpush1.msra.mxu0 0.0
  %88 = vmatprep.subr.mxu0 0.0
  %89 = vmatpush1.msra.mxu0 0.0
  %90 = vmatprep.subr.mxu0 0.0
  %91 = vmatpush1.msra.mxu0 0.0
  %92 = vmatprep.subr.mxu0 0.0
  %93 = vmatpush1.msra.mxu0 0.0
  %94 = vmatprep.subr.mxu0 0.0
  %95 = vmatpush1.msra.mxu0 0.0
  %96 = vmatprep.subr.mxu0 0.0
  %97 = vmatpush1.msra.mxu0 0.0
  %98 = vmatprep.subr.mxu0 0.0
  %99 = vmatpush1.msra.mxu0 0.0
  %100 = vmatprep.mubr.f32.mxu0 0.0
  %101 = vmatmul.mubr.f32.gmra.mrb[0].mxu0 %v31
  %v102 = vpop.f32.mrb[0].mxu0
  %v103 = vadd.f32 %v28, %v102
  %v104 = vpop.f32.mrb[0].mxu0
  %105 = vmatprep.mubr.f32.mxu0 0.0
  %106 = vmatmul.mubr.f32.gmra.mrb[0].mxu0 %v34
  %v107 = vpop.f32.mrb[0].mxu0
  %v108 = vadd.f32 %v28, %v107
  %v109 = vpop.f32.mrb[0].mxu0
  %110 = vdwg.mxu0
  %vm111 = vcmask 261120
  %v113 = vsel %vm111, 0.0, 0
  %115 = vmatprep.subr.mxu0 0.0
  %116 = vmatpush1.msra.mxu0 %v13
  %117 = vmatprep.subr.mxu0 0.0
  %118 = vmatpush1.msra.mxu0 %v14
  %119 = vmatprep.subr.mxu0 0.0
  %120 = vmatpush1.msra.mxu0 %v15
  %121 = vmatprep.subr.mxu0 0.0
  %122 = vmatpush1.msra.mxu0 %v16
  %123 = vmatprep.subr.mxu0 0.0
  %124 = vmatpush1.msra.mxu0 0.0
  %125 = vmatprep.subr.mxu0 0.0
  %126 = vmatpush1.msra.mxu0 0.0
  %127 = vmatprep.subr.mxu0 0.0
  %128 = vmatpush1.msra.mxu0 0.0
  %129 = vmatprep.subr.mxu0 0.0
  %130 = vmatpush1.msra.mxu0 0.0
  %131 = vmatprep.subr.mxu0 0.0
  %132 = vmatpush1.msra.mxu0 0.0
  %133 = vmatprep.subr.mxu0 0.0
  %134 = vmatpush1.msra.mxu0 0.0
  %135 = vmatprep.subr.mxu0 0.0
  %136 = vmatpush1.msra.mxu0 0.0
  %137 = vmatprep.subr.mxu0 0.0
  %138 = vmatpush1.msra.mxu0 0.0
  %139 = vmatprep.subr.mxu0 0.0
  %140 = vmatpush1.msra.mxu0 0.0
  %141 = vmatprep.subr.mxu0 0.0
  %142 = vmatpush1.msra.mxu0 0.0
  %143 = vmatprep.subr.mxu0 0.0
  %144 = vmatpush1.msra.mxu0 0.0
  %145 = vmatprep.subr.mxu0 0.0
  %146 = vmatpush1.msra.mxu0 0.0
  %147 = vmatprep.subr.mxu0 0.0
  %148 = vmatpush1.msra.mxu0 0.0
  %149 = vmatprep.subr.mxu0 0.0
  %150 = vmatpush1.msra.mxu0 0.0
  %151 = vmatprep.subr.mxu0 0.0
  %152 = vmatpush1.msra.mxu0 0.0
  %153 = vmatprep.subr.mxu0 0.0
  %154 = vmatpush1.msra.mxu0 0.0
  %155 = vmatprep.subr.mxu0 0.0
  %156 = vmatpush1.msra.mxu0 0.0
  %157 = vmatprep.subr.mxu0 0.0
  %158 = vmatpush1.msra.mxu0 0.0
  %159 = vmatprep.subr.mxu0 0.0
  %160 = vmatpush1.msra.mxu0 0.0
  %161 = vmatprep.subr.mxu0 0.0
  %162 = vmatpush1.msra.mxu0 0.0
  %163 = vmatprep.subr.mxu0 0.0
  %164 = vmatpush1.msra.mxu0 0.0
  %165 = vmatprep.subr.mxu0 0.0
  %166 = vmatpush1.msra.mxu0 0.0
  %167 = vmatprep.subr.mxu0 0.0
  %168 = vmatpush1.msra.mxu0 0.0
  %169 = vmatprep.subr.mxu0 0.0
  %170 = vmatpush1.msra.mxu0 0.0
  %171 = vmatprep.subr.mxu0 0.0
  %172 = vmatpush1.msra.mxu0 0.0
  %173 = vmatprep.subr.mxu0 0.0
  %174 = vmatpush1.msra.mxu0 0.0
  %175 = vmatprep.subr.mxu0 0.0
  %176 = vmatpush1.msra.mxu0 0.0
  %177 = vmatprep.subr.mxu0 0.0
  %178 = vmatpush1.msra.mxu0 0.0
  %179 = vmatprep.mubr.f32.mxu0 0.0
  %180 = vmatmul.mubr.f32.gmra.mrb[0].mxu0 %v113
  %v181 = vpop.f32.mrb[0].mxu0
  %v182 = vadd.f32 0.0, %v181
  %v183 = vpop.f32.mrb[0].mxu0
  %184 = vdwg.mxu0
  %v185 = vadd.f32 %v103, %v182
  %v186 = vxor.u32 %v185, 2147483648
  %v187 = vmul.f32 %v186, 1.442695
  %v188 = vpow.pop %v187
  %v189 = vadd.f32 %v188, 1.0
  %v190 = vrcp.pop %v189
  %v191 = vmul.f32 1.0, %v190
  %v192 = vtanh.pop %v185
  %v193 = vmul.f32 %v191, 0.0
  %195 = vrot.lane.b32.xlu0 %v192, 64
  %v196 = vpop.permute.xlu0 %195
  %v198 = vmul.f32 %v191, %v196
  %200 = vrot.lane.b32.xlu0 %v198, 32
  %v201 = vpop.permute.xlu0 %200
  %v203 = vadd.f32 %v193, %v201
  %v204 = vtanh.pop %v203
  %206 = vrot.lane.b32.xlu0 %v204, 64
  %v207 = vpop.permute.xlu0 %206
  %v209 = vmul.f32 %v191, %v207
  %211 = vrot.lane.b32.xlu0 %v209, 32
  %v212 = vpop.permute.xlu0 %211
  %vm214 = vcmask 254976
  %215 = vst.msk [vmem:[#allocation2] sm:$0x3] %vm214, %v212
  %v216 = vsel %vm111, %v212, 0
  %218 = vmatprep.subr.mxu0 0.0
  %219 = vmatpush1.msra.mxu0 %v13
  %220 = vmatprep.subr.mxu0 0.0
  %221 = vmatpush1.msra.mxu0 %v14
  %222 = vmatprep.subr.mxu0 0.0
  %223 = vmatpush1.msra.mxu0 %v15
  %224 = vmatprep.subr.mxu0 0.0
  %225 = vmatpush1.msra.mxu0 %v16
  %226 = vmatprep.subr.mxu0 0.0
  %227 = vmatpush1.msra.mxu0 0.0
  %228 = vmatprep.subr.mxu0 0.0
  %229 = vmatpush1.msra.mxu0 0.0
  %230 = vmatprep.subr.mxu0 0.0
  %231 = vmatpush1.msra.mxu0 0.0
  %232 = vmatprep.subr.mxu0 0.0
  %233 = vmatpush1.msra.mxu0 0.0
  %234 = vmatprep.subr.mxu0 0.0
  %235 = vmatpush1.msra.mxu0 0.0
  %236 = vmatprep.subr.mxu0 0.0
  %237 = vmatpush1.msra.mxu0 0.0
  %238 = vmatprep.subr.mxu0 0.0
  %239 = vmatpush1.msra.mxu0 0.0
  %240 = vmatprep.subr.mxu0 0.0
  %241 = vmatpush1.msra.mxu0 0.0
  %242 = vmatprep.subr.mxu0 0.0
  %243 = vmatpush1.msra.mxu0 0.0
  %244 = vmatprep.subr.mxu0 0.0
  %245 = vmatpush1.msra.mxu0 0.0
  %246 = vmatprep.subr.mxu0 0.0
  %247 = vmatpush1.msra.mxu0 0.0
  %248 = vmatprep.subr.mxu0 0.0
  %249 = vmatpush1.msra.mxu0 0.0
  %250 = vmatprep.subr.mxu0 0.0
  %251 = vmatpush1.msra.mxu0 0.0
  %252 = vmatprep.subr.mxu0 0.0
  %253 = vmatpush1.msra.mxu0 0.0
  %254 = vmatprep.subr.mxu0 0.0
  %255 = vmatpush1.msra.mxu0 0.0
  %256 = vmatprep.subr.mxu0 0.0
  %257 = vmatpush1.msra.mxu0 0.0
  %258 = vmatprep.subr.mxu0 0.0
  %259 = vmatpush1.msra.mxu0 0.0
  %260 = vmatprep.subr.mxu0 0.0
  %261 = vmatpush1.msra.mxu0 0.0
  %262 = vmatprep.subr.mxu0 0.0
  %263 = vmatpush1.msra.mxu0 0.0
  %264 = vmatprep.subr.mxu0 0.0
  %265 = vmatpush1.msra.mxu0 0.0
  %266 = vmatprep.subr.mxu0 0.0
  %267 = vmatpush1.msra.mxu0 0.0
  %268 = vmatprep.subr.mxu0 0.0
  %269 = vmatpush1.msra.mxu0 0.0
  %270 = vmatprep.subr.mxu0 0.0
  %271 = vmatpush1.msra.mxu0 0.0
  %272 = vmatprep.subr.mxu0 0.0
  %273 = vmatpush1.msra.mxu0 0.0
  %274 = vmatprep.subr.mxu0 0.0
  %275 = vmatpush1.msra.mxu0 0.0
  %276 = vmatprep.subr.mxu0 0.0
  %277 = vmatpush1.msra.mxu0 0.0
  %278 = vmatprep.subr.mxu0 0.0
  %279 = vmatpush1.msra.mxu0 0.0
  %280 = vmatprep.subr.mxu0 0.0
  %281 = vmatpush1.msra.mxu0 0.0
  %282 = vmatprep.mubr.f32.mxu0 0.0
  %283 = vmatmul.mubr.f32.gmra.mrb[0].mxu0 %v216
  %v284 = vpop.f32.mrb[0].mxu0
  %v285 = vadd.f32 0.0, %v284
  %v286 = vpop.f32.mrb[0].mxu0
  %287 = vdwg.mxu0
  %v289 = vrot.slane %v285, 6
  %v291 = vadd.f32 %v103, %v289
  %v292 = vxor.u32 %v291, 2147483648
  %v293 = vmul.f32 %v292, 1.442695
  %v294 = vpow.pop %v293
  %v295 = vadd.f32 %v294, 1.0
  %v296 = vrcp.pop %v295
  %v297 = vmul.f32 1.0, %v296
  %v298 = vtanh.pop %v291
  %v300 = vrot.slane %v203, 6
  %v302 = vmul.f32 %v297, %v300
  %304 = vrot.lane.b32.xlu0 %v298, 64
  %v305 = vpop.permute.xlu0 %304
  %v307 = vmul.f32 %v297, %v305
  %309 = vrot.lane.b32.xlu0 %v307, 32
  %v310 = vpop.permute.xlu0 %309
  %v312 = vadd.f32 %v302, %v310
  %v313 = vtanh.pop %v312
  %315 = vrot.lane.b32.xlu0 %v313, 64
  %v316 = vpop.permute.xlu0 %315
  %v318 = vmul.f32 %v297, %v316
  %320 = vrot.lane.b32.xlu0 %v318, 32
  %v321 = vpop.permute.xlu0 %320
  %vm323 = vcmask 257026
  %324 = vst.msk [vmem:[#allocation2] sm:$0xc] %vm323, %v321
  %v325 = vrot.slane %v318, 2
  %326 = vrot.lane.b32.xlu0 %v325, 32
  %v327 = vpop.permute.xlu0 %326
  %v328 = vsel %vm111, %v327, 0
  %330 = vmatprep.subr.mxu0 0.0
  %331 = vmatpush1.msra.mxu0 %v13
  %332 = vmatprep.subr.mxu0 0.0
  %333 = vmatpush1.msra.mxu0 %v14
  %334 = vmatprep.subr.mxu0 0.0
  %335 = vmatpush1.msra.mxu0 %v15
  %336 = vmatprep.subr.mxu0 0.0
  %337 = vmatpush1.msra.mxu0 %v16
  %338 = vmatprep.subr.mxu0 0.0
  %339 = vmatpush1.msra.mxu0 0.0
  %340 = vmatprep.subr.mxu0 0.0
  %341 = vmatpush1.msra.mxu0 0.0
  %342 = vmatprep.subr.mxu0 0.0
  %343 = vmatpush1.msra.mxu0 0.0
  %344 = vmatprep.subr.mxu0 0.0
  %345 = vmatpush1.msra.mxu0 0.0
  %346 = vmatprep.subr.mxu0 0.0
  %347 = vmatpush1.msra.mxu0 0.0
  %348 = vmatprep.subr.mxu0 0.0
  %349 = vmatpush1.msra.mxu0 0.0
  %350 = vmatprep.subr.mxu0 0.0
  %351 = vmatpush1.msra.mxu0 0.0
  %352 = vmatprep.subr.mxu0 0.0
  %353 = vmatpush1.msra.mxu0 0.0
  %354 = vmatprep.subr.mxu0 0.0
  %355 = vmatpush1.msra.mxu0 0.0
  %356 = vmatprep.subr.mxu0 0.0
  %357 = vmatpush1.msra.mxu0 0.0
  %358 = vmatprep.subr.mxu0 0.0
  %359 = vmatpush1.msra.mxu0 0.0
  %360 = vmatprep.subr.mxu0 0.0
  %361 = vmatpush1.msra.mxu0 0.0
  %362 = vmatprep.subr.mxu0 0.0
  %363 = vmatpush1.msra.mxu0 0.0
  %364 = vmatprep.subr.mxu0 0.0
  %365 = vmatpush1.msra.mxu0 0.0
  %366 = vmatprep.subr.mxu0 0.0
  %367 = vmatpush1.msra.mxu0 0.0
  %368 = vmatprep.subr.mxu0 0.0
  %369 = vmatpush1.msra.mxu0 0.0
  %370 = vmatprep.subr.mxu0 0.0
  %371 = vmatpush1.msra.mxu0 0.0
  %372 = vmatprep.subr.mxu0 0.0
  %373 = vmatpush1.msra.mxu0 0.0
  %374 = vmatprep.subr.mxu0 0.0
  %375 = vmatpush1.msra.mxu0 0.0
  %376 = vmatprep.subr.mxu0 0.0
  %377 = vmatpush1.msra.mxu0 0.0
  %378 = vmatprep.subr.mxu0 0.0
  %379 = vmatpush1.msra.mxu0 0.0
  %380 = vmatprep.subr.mxu0 0.0
  %381 = vmatpush1.msra.mxu0 0.0
  %382 = vmatprep.subr.mxu0 0.0
  %383 = vmatpush1.msra.mxu0 0.0
  %384 = vmatprep.subr.mxu0 0.0
  %385 = vmatpush1.msra.mxu0 0.0
  %386 = vmatprep.subr.mxu0 0.0
  %387 = vmatpush1.msra.mxu0 0.0
  %388 = vmatprep.subr.mxu0 0.0
  %389 = vmatpush1.msra.mxu0 0.0
  %390 = vmatprep.subr.mxu0 0.0
  %391 = vmatpush1.msra.mxu0 0.0
  %392 = vmatprep.subr.mxu0 0.0
  %393 = vmatpush1.msra.mxu0 0.0
  %394 = vmatprep.mubr.f32.mxu0 0.0
  %395 = vmatmul.mubr.f32.gmra.mrb[0].mxu0 %v328
  %v396 = vpop.f32.mrb[0].mxu0
  %v397 = vadd.f32 0.0, %v396
  %v398 = vpop.f32.mrb[0].mxu0
  %399 = vdwg.mxu0
  %v401 = vrot.slane %v397, 4
  %v403 = vadd.f32 %v103, %v401
  %v404 = vxor.u32 %v403, 2147483648
  %v405 = vmul.f32 %v404, 1.442695
  %v406 = vpow.pop %v405
  %v407 = vadd.f32 %v406, 1.0
  %v408 = vrcp.pop %v407
  %v409 = vmul.f32 1.0, %v408
  %v410 = vtanh.pop %v403
  %v412 = vrot.slane %v312, 6
  %v414 = vmul.f32 %v409, %v412
  %416 = vrot.lane.b32.xlu0 %v410, 64
  %v417 = vpop.permute.xlu0 %416
  %v419 = vmul.f32 %v409, %v417
  %421 = vrot.lane.b32.xlu0 %v419, 32
  %v422 = vpop.permute.xlu0 %421
  %v424 = vadd.f32 %v414, %v422
  %v425 = vtanh.pop %v424
  %427 = vrot.lane.b32.xlu0 %v425, 64
  %v428 = vpop.permute.xlu0 %427
  %v430 = vmul.f32 %v409, %v428
  %432 = vrot.lane.b32.xlu0 %v430, 32
  %v433 = vpop.permute.xlu0 %432
  %vm435 = vcmask 259076
  %436 = vst.msk [vmem:[#allocation2] sm:$0x30] %vm435, %v433
  %v437 = vrot.slane %v430, 4
  %438 = vrot.lane.b32.xlu0 %v437, 32
  %v439 = vpop.permute.xlu0 %438
  %v440 = vsel %vm111, %v439, 0
  %442 = vmatprep.subr.mxu0 0.0
  %443 = vmatpush1.msra.mxu0 %v13
  %444 = vmatprep.subr.mxu0 0.0
  %445 = vmatpush1.msra.mxu0 %v14
  %446 = vmatprep.subr.mxu0 0.0
  %447 = vmatpush1.msra.mxu0 %v15
  %448 = vmatprep.subr.mxu0 0.0
  %449 = vmatpush1.msra.mxu0 %v16
  %450 = vmatprep.subr.mxu0 0.0
  %451 = vmatpush1.msra.mxu0 0.0
  %452 = vmatprep.subr.mxu0 0.0
  %453 = vmatpush1.msra.mxu0 0.0
  %454 = vmatprep.subr.mxu0 0.0
  %455 = vmatpush1.msra.mxu0 0.0
  %456 = vmatprep.subr.mxu0 0.0
  %457 = vmatpush1.msra.mxu0 0.0
  %458 = vmatprep.subr.mxu0 0.0
  %459 = vmatpush1.msra.mxu0 0.0
  %460 = vmatprep.subr.mxu0 0.0
  %461 = vmatpush1.msra.mxu0 0.0
  %462 = vmatprep.subr.mxu0 0.0
  %463 = vmatpush1.msra.mxu0 0.0
  %464 = vmatprep.subr.mxu0 0.0
  %465 = vmatpush1.msra.mxu0 0.0
  %466 = vmatprep.subr.mxu0 0.0
  %467 = vmatpush1.msra.mxu0 0.0
  %468 = vmatprep.subr.mxu0 0.0
  %469 = vmatpush1.msra.mxu0 0.0
  %470 = vmatprep.subr.mxu0 0.0
  %471 = vmatpush1.msra.mxu0 0.0
  %472 = vmatprep.subr.mxu0 0.0
  %473 = vmatpush1.msra.mxu0 0.0
  %474 = vmatprep.subr.mxu0 0.0
  %475 = vmatpush1.msra.mxu0 0.0
  %476 = vmatprep.subr.mxu0 0.0
  %477 = vmatpush1.msra.mxu0 0.0
  %478 = vmatprep.subr.mxu0 0.0
  %479 = vmatpush1.msra.mxu0 0.0
  %480 = vmatprep.subr.mxu0 0.0
  %481 = vmatpush1.msra.mxu0 0.0
  %482 = vmatprep.subr.mxu0 0.0
  %483 = vmatpush1.msra.mxu0 0.0
  %484 = vmatprep.subr.mxu0 0.0
  %485 = vmatpush1.msra.mxu0 0.0
  %486 = vmatprep.subr.mxu0 0.0
  %487 = vmatpush1.msra.mxu0 0.0
  %488 = vmatprep.subr.mxu0 0.0
  %489 = vmatpush1.msra.mxu0 0.0
  %490 = vmatprep.subr.mxu0 0.0
  %491 = vmatpush1.msra.mxu0 0.0
  %492 = vmatprep.subr.mxu0 0.0
  %493 = vmatpush1.msra.mxu0 0.0
  %494 = vmatprep.subr.mxu0 0.0
  %495 = vmatpush1.msra.mxu0 0.0
  %496 = vmatprep.subr.mxu0 0.0
  %497 = vmatpush1.msra.mxu0 0.0
  %498 = vmatprep.subr.mxu0 0.0
  %499 = vmatpush1.msra.mxu0 0.0
  %500 = vmatprep.subr.mxu0 0.0
  %501 = vmatpush1.msra.mxu0 0.0
  %502 = vmatprep.subr.mxu0 0.0
  %503 = vmatpush1.msra.mxu0 0.0
  %504 = vmatprep.subr.mxu0 0.0
  %505 = vmatpush1.msra.mxu0 0.0
  %506 = vmatprep.mubr.f32.mxu0 0.0
  %507 = vmatmul.mubr.f32.gmra.mrb[0].mxu0 %v440
  %v508 = vpop.f32.mrb[0].mxu0
  %v509 = vadd.f32 0.0, %v508
  %v510 = vpop.f32.mrb[0].mxu0
  %511 = vdwg.mxu0
  %v513 = vrot.slane %v509, 2
  %v515 = vadd.f32 %v103, %v513
  %v516 = vxor.u32 %v515, 2147483648
  %v517 = vmul.f32 %v516, 1.442695
  %v518 = vpow.pop %v517
  %v519 = vadd.f32 %v518, 1.0
  %v520 = vrcp.pop %v519
  %v521 = vmul.f32 1.0, %v520
  %v522 = vtanh.pop %v515
  %v524 = vrot.slane %v424, 6
  %v526 = vmul.f32 %v521, %v524
  %528 = vrot.lane.b32.xlu0 %v522, 64
  %v529 = vpop.permute.xlu0 %528
  %v531 = vmul.f32 %v521, %v529
  %533 = vrot.lane.b32.xlu0 %v531, 32
  %v534 = vpop.permute.xlu0 %533
  %v536 = vadd.f32 %v526, %v534
  %v537 = vtanh.pop %v536
  %539 = vrot.lane.b32.xlu0 %v537, 64
  %v540 = vpop.permute.xlu0 %539
  %v542 = vmul.f32 %v521, %v540
  %544 = vrot.lane.b32.xlu0 %v542, 32
  %v545 = vpop.permute.xlu0 %544
  %vm547 = vcmask 261126
  %548 = vst.msk [vmem:[#allocation2] sm:$0xc0] %vm547, %v545
  %v549 = vrot.slane %v542, 6
  %550 = vrot.lane.b32.xlu0 %v549, 32
  %v551 = vpop.permute.xlu0 %550
  %v552 = vsel %vm111, %v551, 0
  %554 = vmatprep.subr.mxu0 0.0
  %555 = vmatpush1.msra.mxu0 %v13
  %556 = vmatprep.subr.mxu0 0.0
  %557 = vmatpush1.msra.mxu0 %v14
  %558 = vmatprep.subr.mxu0 0.0
  %559 = vmatpush1.msra.mxu0 %v15
  %560 = vmatprep.subr.mxu0 0.0
  %561 = vmatpush1.msra.mxu0 %v16
  %562 = vmatprep.subr.mxu0 0.0
  %563 = vmatpush1.msra.mxu0 0.0
  %564 = vmatprep.subr.mxu0 0.0
  %565 = vmatpush1.msra.mxu0 0.0
  %566 = vmatprep.subr.mxu0 0.0
  %567 = vmatpush1.msra.mxu0 0.0
  %568 = vmatprep.subr.mxu0 0.0
  %569 = vmatpush1.msra.mxu0 0.0
  %570 = vmatprep.subr.mxu0 0.0
  %571 = vmatpush1.msra.mxu0 0.0
  %572 = vmatprep.subr.mxu0 0.0
  %573 = vmatpush1.msra.mxu0 0.0
  %574 = vmatprep.subr.mxu0 0.0
  %575 = vmatpush1.msra.mxu0 0.0
  %576 = vmatprep.subr.mxu0 0.0
  %577 = vmatpush1.msra.mxu0 0.0
  %578 = vmatprep.subr.mxu0 0.0
  %579 = vmatpush1.msra.mxu0 0.0
  %580 = vmatprep.subr.mxu0 0.0
  %581 = vmatpush1.msra.mxu0 0.0
  %582 = vmatprep.subr.mxu0 0.0
  %583 = vmatpush1.msra.mxu0 0.0
  %584 = vmatprep.subr.mxu0 0.0
  %585 = vmatpush1.msra.mxu0 0.0
  %586 = vmatprep.subr.mxu0 0.0
  %587 = vmatpush1.msra.mxu0 0.0
  %588 = vmatprep.subr.mxu0 0.0
  %589 = vmatpush1.msra.mxu0 0.0
  %590 = vmatprep.subr.mxu0 0.0
  %591 = vmatpush1.msra.mxu0 0.0
  %592 = vmatprep.subr.mxu0 0.0
  %593 = vmatpush1.msra.mxu0 0.0
  %594 = vmatprep.subr.mxu0 0.0
  %595 = vmatpush1.msra.mxu0 0.0
  %596 = vmatprep.subr.mxu0 0.0
  %597 = vmatpush1.msra.mxu0 0.0
  %598 = vmatprep.subr.mxu0 0.0
  %599 = vmatpush1.msra.mxu0 0.0
  %600 = vmatprep.subr.mxu0 0.0
  %601 = vmatpush1.msra.mxu0 0.0
  %602 = vmatprep.subr.mxu0 0.0
  %603 = vmatpush1.msra.mxu0 0.0
  %604 = vmatprep.subr.mxu0 0.0
  %605 = vmatpush1.msra.mxu0 0.0
  %606 = vmatprep.subr.mxu0 0.0
  %607 = vmatpush1.msra.mxu0 0.0
  %608 = vmatprep.subr.mxu0 0.0
  %609 = vmatpush1.msra.mxu0 0.0
  %610 = vmatprep.subr.mxu0 0.0
  %611 = vmatpush1.msra.mxu0 0.0
  %612 = vmatprep.subr.mxu0 0.0
  %613 = vmatpush1.msra.mxu0 0.0
  %614 = vmatprep.subr.mxu0 0.0
  %615 = vmatpush1.msra.mxu0 0.0
  %616 = vmatprep.subr.mxu0 0.0
  %617 = vmatpush1.msra.mxu0 0.0
  %618 = vmatprep.mubr.f32.mxu0 0.0
  %619 = vmatmul.mubr.f32.gmra.mrb[0].mxu0 %v552
  %v620 = vpop.f32.mrb[0].mxu0
  %v621 = vadd.f32 0.0, %v620
  %v622 = vpop.f32.mrb[0].mxu0
  %623 = vdwg.mxu0
  %v624 = vadd.f32 %v108, %v621
  %v625 = vxor.u32 %v624, 2147483648
  %v626 = vmul.f32 %v625, 1.442695
  %v627 = vpow.pop %v626
  %v628 = vadd.f32 %v627, 1.0
  %v629 = vrcp.pop %v628
  %v630 = vmul.f32 1.0, %v629
  %v631 = vtanh.pop %v624
  %v633 = vrot.slane %v536, 6
  %v635 = vmul.f32 %v630, %v633
  %637 = vrot.lane.b32.xlu0 %v631, 64
  %v638 = vpop.permute.xlu0 %637
  %v640 = vmul.f32 %v630, %v638
  %642 = vrot.lane.b32.xlu0 %v640, 32
  %v643 = vpop.permute.xlu0 %642
  %v645 = vadd.f32 %v635, %v643
  %v646 = vtanh.pop %v645
  %648 = vrot.lane.b32.xlu0 %v646, 64
  %v649 = vpop.permute.xlu0 %648
  %v651 = vmul.f32 %v630, %v649
  %653 = vrot.lane.b32.xlu0 %v651, 32
  %v654 = vpop.permute.xlu0 %653
  %656 = vst.msk [vmem:[#allocation2 + $0x8] sm:$0x3] %vm214, %v654
  %v657 = vsel %vm111, %v654, 0
  %659 = vmatprep.subr.mxu0 0.0
  %660 = vmatpush1.msra.mxu0 %v13
  %661 = vmatprep.subr.mxu0 0.0
  %662 = vmatpush1.msra.mxu0 %v14
  %663 = vmatprep.subr.mxu0 0.0
  %664 = vmatpush1.msra.mxu0 %v15
  %665 = vmatprep.subr.mxu0 0.0
  %666 = vmatpush1.msra.mxu0 %v16
  %667 = vmatprep.subr.mxu0 0.0
  %668 = vmatpush1.msra.mxu0 0.0
  %669 = vmatprep.subr.mxu0 0.0
  %670 = vmatpush1.msra.mxu0 0.0
  %671 = vmatprep.subr.mxu0 0.0
  %672 = vmatpush1.msra.mxu0 0.0
  %673 = vmatprep.subr.mxu0 0.0
  %674 = vmatpush1.msra.mxu0 0.0
  %675 = vmatprep.subr.mxu0 0.0
  %676 = vmatpush1.msra.mxu0 0.0
  %677 = vmatprep.subr.mxu0 0.0
  %678 = vmatpush1.msra.mxu0 0.0
  %679 = vmatprep.subr.mxu0 0.0
  %680 = vmatpush1.msra.mxu0 0.0
  %681 = vmatprep.subr.mxu0 0.0
  %682 = vmatpush1.msra.mxu0 0.0
  %683 = vmatprep.subr.mxu0 0.0
  %684 = vmatpush1.msra.mxu0 0.0
  %685 = vmatprep.subr.mxu0 0.0
  %686 = vmatpush1.msra.mxu0 0.0
  %687 = vmatprep.subr.mxu0 0.0
  %688 = vmatpush1.msra.mxu0 0.0
  %689 = vmatprep.subr.mxu0 0.0
  %690 = vmatpush1.msra.mxu0 0.0
  %691 = vmatprep.subr.mxu0 0.0
  %692 = vmatpush1.msra.mxu0 0.0
  %693 = vmatprep.subr.mxu0 0.0
  %694 = vmatpush1.msra.mxu0 0.0
  %695 = vmatprep.subr.mxu0 0.0
  %696 = vmatpush1.msra.mxu0 0.0
  %697 = vmatprep.subr.mxu0 0.0
  %698 = vmatpush1.msra.mxu0 0.0
  %699 = vmatprep.subr.mxu0 0.0
  %700 = vmatpush1.msra.mxu0 0.0
  %701 = vmatprep.subr.mxu0 0.0
  %702 = vmatpush1.msra.mxu0 0.0
  %703 = vmatprep.subr.mxu0 0.0
  %704 = vmatpush1.msra.mxu0 0.0
  %705 = vmatprep.subr.mxu0 0.0
  %706 = vmatpush1.msra.mxu0 0.0
  %707 = vmatprep.subr.mxu0 0.0
  %708 = vmatpush1.msra.mxu0 0.0
  %709 = vmatprep.subr.mxu0 0.0
  %710 = vmatpush1.msra.mxu0 0.0
  %711 = vmatprep.subr.mxu0 0.0
  %712 = vmatpush1.msra.mxu0 0.0
  %713 = vmatprep.subr.mxu0 0.0
  %714 = vmatpush1.msra.mxu0 0.0
  %715 = vmatprep.subr.mxu0 0.0
  %716 = vmatpush1.msra.mxu0 0.0
  %717 = vmatprep.subr.mxu0 0.0
  %718 = vmatpush1.msra.mxu0 0.0
  %719 = vmatprep.subr.mxu0 0.0
  %720 = vmatpush1.msra.mxu0 0.0
  %721 = vmatprep.subr.mxu0 0.0
  %722 = vmatpush1.msra.mxu0 0.0
  %723 = vmatprep.mubr.f32.mxu0 0.0
  %724 = vmatmul.mubr.f32.gmra.mrb[0].mxu0 %v657
  %v725 = vpop.f32.mrb[0].mxu0
  %v726 = vadd.f32 0.0, %v725
  %v727 = vpop.f32.mrb[0].mxu0
  %728 = vdwg.mxu0
  %v730 = vrot.slane %v726, 6
  %v732 = vadd.f32 %v108, %v730
  %v733 = vxor.u32 %v732, 2147483648
  %v734 = vmul.f32 %v733, 1.442695
  %v735 = vpow.pop %v734
  %v736 = vadd.f32 %v735, 1.0
  %v737 = vrcp.pop %v736
  %v738 = vmul.f32 1.0, %v737
  %v739 = vtanh.pop %v732
  %v741 = vrot.slane %v645, 6
  %v743 = vmul.f32 %v738, %v741
  %745 = vrot.lane.b32.xlu0 %v739, 64
  %v746 = vpop.permute.xlu0 %745
  %v748 = vmul.f32 %v738, %v746
  %750 = vrot.lane.b32.xlu0 %v748, 32
  %v751 = vpop.permute.xlu0 %750
  %v753 = vadd.f32 %v743, %v751
  %v754 = vtanh.pop %v753
  %756 = vrot.lane.b32.xlu0 %v754, 64
  %v757 = vpop.permute.xlu0 %756
  %v759 = vmul.f32 %v738, %v757
  %761 = vrot.lane.b32.xlu0 %v759, 32
  %v762 = vpop.permute.xlu0 %761
  %764 = vst.msk [vmem:[#allocation2 + $0x8] sm:$0xc] %vm323, %v762
  %v765 = vrot.slane %v759, 2
  %766 = vrot.lane.b32.xlu0 %v765, 32
  %v767 = vpop.permute.xlu0 %766
  %v768 = vsel %vm111, %v767, 0
  %770 = vmatprep.subr.mxu0 0.0
  %771 = vmatpush1.msra.mxu0 %v13
  %772 = vmatprep.subr.mxu0 0.0
  %773 = vmatpush1.msra.mxu0 %v14
  %774 = vmatprep.subr.mxu0 0.0
  %775 = vmatpush1.msra.mxu0 %v15
  %776 = vmatprep.subr.mxu0 0.0
  %777 = vmatpush1.msra.mxu0 %v16
  %778 = vmatprep.subr.mxu0 0.0
  %779 = vmatpush1.msra.mxu0 0.0
  %780 = vmatprep.subr.mxu0 0.0
  %781 = vmatpush1.msra.mxu0 0.0
  %782 = vmatprep.subr.mxu0 0.0
  %783 = vmatpush1.msra.mxu0 0.0
  %784 = vmatprep.subr.mxu0 0.0
  %785 = vmatpush1.msra.mxu0 0.0
  %786 = vmatprep.subr.mxu0 0.0
  %787 = vmatpush1.msra.mxu0 0.0
  %788 = vmatprep.subr.mxu0 0.0
  %789 = vmatpush1.msra.mxu0 0.0
  %790 = vmatprep.subr.mxu0 0.0
  %791 = vmatpush1.msra.mxu0 0.0
  %792 = vmatprep.subr.mxu0 0.0
  %793 = vmatpush1.msra.mxu0 0.0
  %794 = vmatprep.subr.mxu0 0.0
  %795 = vmatpush1.msra.mxu0 0.0
  %796 = vmatprep.subr.mxu0 0.0
  %797 = vmatpush1.msra.mxu0 0.0
  %798 = vmatprep.subr.mxu0 0.0
  %799 = vmatpush1.msra.mxu0 0.0
  %800 = vmatprep.subr.mxu0 0.0
  %801 = vmatpush1.msra.mxu0 0.0
  %802 = vmatprep.subr.mxu0 0.0
  %803 = vmatpush1.msra.mxu0 0.0
  %804 = vmatprep.subr.mxu0 0.0
  %805 = vmatpush1.msra.mxu0 0.0
  %806 = vmatprep.subr.mxu0 0.0
  %807 = vmatpush1.msra.mxu0 0.0
  %808 = vmatprep.subr.mxu0 0.0
  %809 = vmatpush1.msra.mxu0 0.0
  %810 = vmatprep.subr.mxu0 0.0
  %811 = vmatpush1.msra.mxu0 0.0
  %812 = vmatprep.subr.mxu0 0.0
  %813 = vmatpush1.msra.mxu0 0.0
  %814 = vmatprep.subr.mxu0 0.0
  %815 = vmatpush1.msra.mxu0 0.0
  %816 = vmatprep.subr.mxu0 0.0
  %817 = vmatpush1.msra.mxu0 0.0
  %818 = vmatprep.subr.mxu0 0.0
  %819 = vmatpush1.msra.mxu0 0.0
  %820 = vmatprep.subr.mxu0 0.0
  %821 = vmatpush1.msra.mxu0 0.0
  %822 = vmatprep.subr.mxu0 0.0
  %823 = vmatpush1.msra.mxu0 0.0
  %824 = vmatprep.subr.mxu0 0.0
  %825 = vmatpush1.msra.mxu0 0.0
  %826 = vmatprep.subr.mxu0 0.0
  %827 = vmatpush1.msra.mxu0 0.0
  %828 = vmatprep.subr.mxu0 0.0
  %829 = vmatpush1.msra.mxu0 0.0
  %830 = vmatprep.subr.mxu0 0.0
  %831 = vmatpush1.msra.mxu0 0.0
  %832 = vmatprep.subr.mxu0 0.0
  %833 = vmatpush1.msra.mxu0 0.0
  %834 = vmatprep.mubr.f32.mxu0 0.0
  %835 = vmatmul.mubr.f32.gmra.mrb[0].mxu0 %v768
  %v836 = vpop.f32.mrb[0].mxu0
  %v837 = vadd.f32 0.0, %v836
  %v838 = vpop.f32.mrb[0].mxu0
  %839 = vdwg.mxu0
  %v841 = vrot.slane %v837, 4
  %v843 = vadd.f32 %v108, %v841
  %v844 = vxor.u32 %v843, 2147483648
  %v845 = vmul.f32 %v844, 1.442695
  %v846 = vpow.pop %v845
  %v847 = vadd.f32 %v846, 1.0
  %v848 = vrcp.pop %v847
  %v849 = vmul.f32 1.0, %v848
  %v850 = vtanh.pop %v843
  %v852 = vrot.slane %v753, 6
  %v854 = vmul.f32 %v849, %v852
  %856 = vrot.lane.b32.xlu0 %v850, 64
  %v857 = vpop.permute.xlu0 %856
  %v859 = vmul.f32 %v849, %v857
  %861 = vrot.lane.b32.xlu0 %v859, 32
  %v862 = vpop.permute.xlu0 %861
  %v864 = vadd.f32 %v854, %v862
  %v865 = vtanh.pop %v864
  %867 = vrot.lane.b32.xlu0 %v865, 64
  %v868 = vpop.permute.xlu0 %867
  %v870 = vmul.f32 %v849, %v868
  %872 = vrot.lane.b32.xlu0 %v870, 32
  %v873 = vpop.permute.xlu0 %872
  %875 = vst.msk [vmem:[#allocation2 + $0x8] sm:$0x30] %vm435, %v873
  %v876 = vrot.slane %v870, 4
  %877 = vrot.lane.b32.xlu0 %v876, 32
  %v878 = vpop.permute.xlu0 %877
  %v879 = vsel %vm111, %v878, 0
  %881 = vmatprep.subr.mxu0 0.0
  %882 = vmatpush1.msra.mxu0 %v13
  %883 = vmatprep.subr.mxu0 0.0
  %884 = vmatpush1.msra.mxu0 %v14
  %885 = vmatprep.subr.mxu0 0.0
  %886 = vmatpush1.msra.mxu0 %v15
  %887 = vmatprep.subr.mxu0 0.0
  %888 = vmatpush1.msra.mxu0 %v16
  %889 = vmatprep.subr.mxu0 0.0
  %890 = vmatpush1.msra.mxu0 0.0
  %891 = vmatprep.subr.mxu0 0.0
  %892 = vmatpush1.msra.mxu0 0.0
  %893 = vmatprep.subr.mxu0 0.0
  %894 = vmatpush1.msra.mxu0 0.0
  %895 = vmatprep.subr.mxu0 0.0
  %896 = vmatpush1.msra.mxu0 0.0
  %897 = vmatprep.subr.mxu0 0.0
  %898 = vmatpush1.msra.mxu0 0.0
  %899 = vmatprep.subr.mxu0 0.0
  %900 = vmatpush1.msra.mxu0 0.0
  %901 = vmatprep.subr.mxu0 0.0
  %902 = vmatpush1.msra.mxu0 0.0
  %903 = vmatprep.subr.mxu0 0.0
  %904 = vmatpush1.msra.mxu0 0.0
  %905 = vmatprep.subr.mxu0 0.0
  %906 = vmatpush1.msra.mxu0 0.0
  %907 = vmatprep.subr.mxu0 0.0
  %908 = vmatpush1.msra.mxu0 0.0
  %909 = vmatprep.subr.mxu0 0.0
  %910 = vmatpush1.msra.mxu0 0.0
  %911 = vmatprep.subr.mxu0 0.0
  %912 = vmatpush1.msra.mxu0 0.0
  %913 = vmatprep.subr.mxu0 0.0
  %914 = vmatpush1.msra.mxu0 0.0
  %915 = vmatprep.subr.mxu0 0.0
  %916 = vmatpush1.msra.mxu0 0.0
  %917 = vmatprep.subr.mxu0 0.0
  %918 = vmatpush1.msra.mxu0 0.0
  %919 = vmatprep.subr.mxu0 0.0
  %920 = vmatpush1.msra.mxu0 0.0
  %921 = vmatprep.subr.mxu0 0.0
  %922 = vmatpush1.msra.mxu0 0.0
  %923 = vmatprep.subr.mxu0 0.0
  %924 = vmatpush1.msra.mxu0 0.0
  %925 = vmatprep.subr.mxu0 0.0
  %926 = vmatpush1.msra.mxu0 0.0
  %927 = vmatprep.subr.mxu0 0.0
  %928 = vmatpush1.msra.mxu0 0.0
  %929 = vmatprep.subr.mxu0 0.0
  %930 = vmatpush1.msra.mxu0 0.0
  %931 = vmatprep.subr.mxu0 0.0
  %932 = vmatpush1.msra.mxu0 0.0
  %933 = vmatprep.subr.mxu0 0.0
  %934 = vmatpush1.msra.mxu0 0.0
  %935 = vmatprep.subr.mxu0 0.0
  %936 = vmatpush1.msra.mxu0 0.0
  %937 = vmatprep.subr.mxu0 0.0
  %938 = vmatpush1.msra.mxu0 0.0
  %939 = vmatprep.subr.mxu0 0.0
  %940 = vmatpush1.msra.mxu0 0.0
  %941 = vmatprep.subr.mxu0 0.0
  %942 = vmatpush1.msra.mxu0 0.0
  %943 = vmatprep.subr.mxu0 0.0
  %944 = vmatpush1.msra.mxu0 0.0
  %945 = vmatprep.mubr.f32.mxu0 0.0
  %946 = vmatmul.mubr.f32.gmra.mrb[0].mxu0 %v879
  %v947 = vpop.f32.mrb[0].mxu0
  %v948 = vadd.f32 0.0, %v947
  %v949 = vpop.f32.mrb[0].mxu0
  %950 = vdwg.mxu0
  %v952 = vrot.slane %v948, 2
  %v954 = vadd.f32 %v108, %v952
  %v955 = vxor.u32 %v954, 2147483648
  %v956 = vmul.f32 %v955, 1.442695
  %v957 = vpow.pop %v956
  %v958 = vadd.f32 %v957, 1.0
  %v959 = vrcp.pop %v958
  %v960 = vmul.f32 1.0, %v959
  %v961 = vtanh.pop %v954
  %v963 = vrot.slane %v864, 6
  %v965 = vmul.f32 %v960, %v963
  %967 = vrot.lane.b32.xlu0 %v961, 64
  %v968 = vpop.permute.xlu0 %967
  %v970 = vmul.f32 %v960, %v968
  %972 = vrot.lane.b32.xlu0 %v970, 32
  %v973 = vpop.permute.xlu0 %972
  %v975 = vadd.f32 %v965, %v973
  %v976 = vtanh.pop %v975
  %978 = vrot.lane.b32.xlu0 %v976, 64
  %v979 = vpop.permute.xlu0 %978
  %v981 = vmul.f32 %v960, %v979
  %983 = vrot.lane.b32.xlu0 %v981, 32
  %v984 = vpop.permute.xlu0 %983
  %986 = vst.msk [vmem:[#allocation2 + $0x8] sm:$0xc0] %vm547, %v984
  %v987 = vld [vmem:[#allocation2] sm:$0xff]
  %v988 = vld [vmem:[#allocation2 + $0x8] sm:$0xff]
  %v989 = vlaneseq
  %v990 = vshrl.u32 %v989, 7
  %v991 = vsub.s32 0, %v990
  %v992 = vrot.slane %v22, %v991
  %v994 = vsel %vm111, %v987, 0
  %v997 = vsel %vm111, %v988, 0
  %999 = vmatprep.subr.mxu0 0.0
  %1000 = vmatpush1.msra.mxu0 %v18
  %1001 = vmatprep.subr.mxu0 0.0
  %1002 = vmatpush1.msra.mxu0 %v19
  %1003 = vmatprep.subr.mxu0 0.0
  %1004 = vmatpush1.msra.mxu0 %v20
  %1005 = vmatprep.subr.mxu0 0.0
  %1006 = vmatpush1.msra.mxu0 %v21
  %1007 = vmatprep.subr.mxu0 0.0
  %1008 = vmatpush1.msra.mxu0 0.0
  %1009 = vmatprep.subr.mxu0 0.0
  %1010 = vmatpush1.msra.mxu0 0.0
  %1011 = vmatprep.subr.mxu0 0.0
  %1012 = vmatpush1.msra.mxu0 0.0
  %1013 = vmatprep.subr.mxu0 0.0
  %1014 = vmatpush1.msra.mxu0 0.0
  %1015 = vmatprep.subr.mxu0 0.0
  %1016 = vmatpush1.msra.mxu0 0.0
  %1017 = vmatprep.subr.mxu0 0.0
  %1018 = vmatpush1.msra.mxu0 0.0
  %1019 = vmatprep.subr.mxu0 0.0
  %1020 = vmatpush1.msra.mxu0 0.0
  %1021 = vmatprep.subr.mxu0 0.0
  %1022 = vmatpush1.msra.mxu0 0.0
  %1023 = vmatprep.subr.mxu0 0.0
  %1024 = vmatpush1.msra.mxu0 0.0
  %1025 = vmatprep.subr.mxu0 0.0
  %1026 = vmatpush1.msra.mxu0 0.0
  %1027 = vmatprep.subr.mxu0 0.0
  %1028 = vmatpush1.msra.mxu0 0.0
  %1029 = vmatprep.subr.mxu0 0.0
  %1030 = vmatpush1.msra.mxu0 0.0
  %1031 = vmatprep.subr.mxu0 0.0
  %1032 = vmatpush1.msra.mxu0 0.0
  %1033 = vmatprep.subr.mxu0 0.0
  %1034 = vmatpush1.msra.mxu0 0.0
  %1035 = vmatprep.subr.mxu0 0.0
  %1036 = vmatpush1.msra.mxu0 0.0
  %1037 = vmatprep.subr.mxu0 0.0
  %1038 = vmatpush1.msra.mxu0 0.0
  %1039 = vmatprep.subr.mxu0 0.0
  %1040 = vmatpush1.msra.mxu0 0.0
  %1041 = vmatprep.subr.mxu0 0.0
  %1042 = vmatpush1.msra.mxu0 0.0
  %1043 = vmatprep.subr.mxu0 0.0
  %1044 = vmatpush1.msra.mxu0 0.0
  %1045 = vmatprep.subr.mxu0 0.0
  %1046 = vmatpush1.msra.mxu0 0.0
  %1047 = vmatprep.subr.mxu0 0.0
  %1048 = vmatpush1.msra.mxu0 0.0
  %1049 = vmatprep.subr.mxu0 0.0
  %1050 = vmatpush1.msra.mxu0 0.0
  %1051 = vmatprep.subr.mxu0 0.0
  %1052 = vmatpush1.msra.mxu0 0.0
  %1053 = vmatprep.subr.mxu0 0.0
  %1054 = vmatpush1.msra.mxu0 0.0
  %1055 = vmatprep.subr.mxu0 0.0
  %1056 = vmatpush1.msra.mxu0 0.0
  %1057 = vmatprep.subr.mxu0 0.0
  %1058 = vmatpush1.msra.mxu0 0.0
  %1059 = vmatprep.subr.mxu0 0.0
  %1060 = vmatpush1.msra.mxu0 0.0
  %1061 = vmatprep.subr.mxu0 0.0
  %1062 = vmatpush1.msra.mxu0 0.0
  %1063 = vmatprep.mubr.f32.mxu0 0.0
  %1064 = vmatmul.mubr.f32.gmra.mrb[0].mxu0 %v994
  %v1065 = vpop.f32.mrb[0].mxu0
  %v1066 = vadd.f32 %v992, %v1065
  %v1067 = vpop.f32.mrb[0].mxu0
  %1068 = vmatprep.mubr.f32.mxu0 0.0
  %1069 = vmatmul.mubr.f32.gmra.mrb[0].mxu0 %v997
  %v1070 = vpop.f32.mrb[0].mxu0
  %v1071 = vadd.f32 %v992, %v1070
  %v1072 = vpop.f32.mrb[0].mxu0
  %1073 = vdwg.mxu0
  %v1074 = vlaneseq
  %v1075 = vand.u32 %v1074, 127
  %vm1076 = vcmp.ge.s32.totalorder %v1075, 40
  %vm1077 = vcmp.lt.s32.totalorder %v1075, 80
  %vm1078 = vmand %vm1076, %vm1077
  %vm1079 = vcmp.ge.s32.totalorder %v1075, 80
  %vm1080 = vcmp.lt.s32.totalorder %v1075, 85
  %vm1081 = vmand %vm1079, %vm1080
  %vm1082 = vcmp.eq.s32.totalorder %v1075, 86
  %v1083 = vsel %vm1081, %v1066, -1e+30
  %v1084 = vsel %vm1081, %v1071, -1e+30
  %1085 = vmax.xlane.f32.xlu0 %v1083
  %v1086 = vpop.xlane.xlu0 %1085
  %1087 = vmax.xlane.f32.xlu0 %v1084
  %v1088 = vpop.xlane.xlu0 %1087
  %v1089 = vsub.f32 %v1083, %v1086
  %v1090 = vsub.f32 %v1084, %v1088
  %v1091 = vmul.f32 %v1089, 1.442695
  %v1092 = vpow.pop %v1091
  %v1093 = vmul.f32 %v1090, 1.442695
  %v1094 = vpow.pop %v1093
  %1095 = vadd.xlane.f32.xlu0 %v1092
  %v1096 = vpop.xlane.xlu0 %1095
  %1097 = vadd.xlane.f32.xlu0 %v1094
  %v1098 = vpop.xlane.xlu0 %1097
  %v1099 = vlog2.pop %v1096
  %v1100 = vmul.f32 %v1099, 0.6931472
  %v1101 = vlog2.pop %v1098
  %v1102 = vmul.f32 %v1101, 0.6931472
  %v1103 = vadd.f32 %v1100, %v1086
  %v1104 = vadd.f32 %v1102, %v1088
  %v1105 = vmul.f32 %v1066, 1.442695
  %v1106 = vpow.pop %v1105
  %v1107 = vmul.f32 %v1071, 1.442695
  %v1108 = vpow.pop %v1107
  %v1109 = vsel %vm1078, %v1106, %v1066
  %v1110 = vsel %vm1078, %v1108, %v1071
  %v1111 = vsub.f32 %v1066, %v1103
  %v1112 = vsub.f32 %v1071, %v1104
  %v1113 = vsel %vm1081, %v1111, %v1109
  %v1114 = vsel %vm1081, %v1112, %v1110
  %v1115 = vxor.u32 %v1066, 2147483648
  %v1116 = vxor.u32 %v1071, 2147483648
  %v1117 = vmul.f32 %v1115, 1.442695
  %v1118 = vpow.pop %v1117
  %v1119 = vmul.f32 %v1116, 1.442695
  %v1120 = vpow.pop %v1119
  %v1121 = vadd.f32 %v1118, 1.0
  %v1122 = vadd.f32 %v1120, 1.0
  %v1123 = vrcp.pop %v1121
  %v1124 = vmul.f32 1.0, %v1123
  %v1125 = vrcp.pop %v1122
  %v1126 = vmul.f32 1.0, %v1125
  %v1127 = vsel %vm1082, %v1124, %v1113
  %v1128 = vsel %vm1082, %v1126, %v1114
  %1129 = vst [vmem:[%s2] sm:$0xff] %v1127
  %1130 = vst [vmem:[%s2 + $0x8] sm:$0xff] %v1128
  // Predicated region
  $region10: #{mixture_density_lstm_forward.1} parent=0 // pred_check
    _
  $region11: #{mixture_density_lstm_forward.1} parent=0 // pred_check_branch
    %1132 = sbr.rel (0) target = $region13
  $region12: #{mixture_density_lstm_forward.1} parent=0 // pred_region
    _
  $region13: #{mixture_density_lstm_forward.1} parent=0 // pred_fallthru
    _
  // Predicated region
  $region14: #{mixture_density_lstm_forward.1} parent=0 // pred_check
    _
  $region15: #{mixture_density_lstm_forward.1} parent=0 // pred_check_branch
    %1134 = sbr.rel (0) target = $region17
  $region16: #{mixture_density_lstm_forward.1} parent=0 // pred_region
    _
  $region17: #{mixture_density_lstm_forward.1} parent=0 // pred_fallthru
    _

</llo_original>
